<compile_context>
chip_gen: v5e
topology: v5e:2x2
jax: 0.10.0
libtpu: 0.0.40
codegen_flags: <defaults>
</compile_context>

<pallas_src>
import jax
import jax.numpy as jnp
from jax.experimental import pallas as pl
from jax.experimental.pallas import tpu as pltpu


def _attention_kernel(feat_ref,      # VMEM: (bt, S, C)  feature block
                      qk_ref,        # VMEM: (bt, H, C)  block-diag (q @ Wk)
                      wv_bd_ref,     # VMEM: (C, C)      kron(I_H, Wv^T)
                      bv_ref,        # VMEM: (1, C)      tiled value bias
                      mask_ref,      # VMEM: (H, C)      head-ownership mask
                      out_ref):      # VMEM: (bt, S, C)
    feat = feat_ref[...]                                        # (bt, S, C)

    # --- scores with Wk folded into the query (no K materialized) -----------
    # scores[b,h,s] = sum_c qk_bd[b,h,c] * feat[b,s,c]
    scores = jnp.einsum('bhc,bsc->bhs', qk_ref[...], feat,
                        preferred_element_type=jnp.float32)     # (bt, H, S)
    scores = scores - jnp.max(scores, axis=-1, keepdims=True)
    e = jnp.exp(scores)
    # exact normalization: sum_s w = 1 is required by the Wv-after-softmax fold
    w = e / jnp.sum(e, axis=-1, keepdims=True)                  # (bt, H, S)

    # --- weighted feature row per head, then keep each head's own block -----
    ctx = jnp.einsum('bhs,bsc->bhc', w, feat,
                     preferred_element_type=jnp.float32)        # (bt, H, C)
    ctx_row = jnp.sum(ctx * mask_ref[...][None, :, :], axis=1)  # (bt, C)

    # --- value projection folded to after the softmax (tiny matmul) ---------
    out_row = jnp.dot(ctx_row, wv_bd_ref[...],
                      preferred_element_type=jnp.float32) + bv_ref[...]  # (bt, C)

    # rows are identical across steps -> broadcast only at the residual add
    out_ref[...] = out_row[:, None, :] + feat


def _pick_batch_tile(B, S, C, itemsize=4, target_bytes=1 << 20):
    """Largest divisor of B whose feature block is <= ~1 MiB, preferring >=2
    grid programs (pipelining; shards the two TensorCores on v7x)."""
    per_b = max(1, S * C * itemsize)
    divisors = [d for d in range(1, B + 1) if B % d == 0]
    fit = [d for d in divisors if d * per_b <= target_bytes] or [1]
    bt = max(fit)
    if B // bt < 2:
        two_step = [d for d in fit if B // d >= 2]
        if two_step:
            bt = max(two_step)
    return bt


def enhanced_dynamic_channel_attention(features, preference, params, *,
                                       batch_tile=None):
    """features: (B, S, C) f32, preference: (B, H) f32."""
    B, S, C = features.shape
    H = preference.shape[1]
    assert C % H == 0, "feature_channels must be divisible by preference_dim"
    hd = C // H

    wq, bq, wk, bk, wv, bv = params
    del bk  # uniform q.bk score offset cancels exactly under softmax

    if batch_tile is None:
        batch_tile = _pick_batch_tile(B, S, C, features.dtype.itemsize)
    assert B % batch_tile == 0

    eye = jnp.eye(H, dtype=jnp.float32)

    # hoisted query Linear(1, hd):  q[b,h,:] = p[b,h] * wq[:,0] + bq
    q_all = preference[:, :, None] * wq[:, 0][None, None, :] + bq[None, None, :]
    # fold Wk into the query:  qk[b,h,e] = sum_d q[b,h,d] * wk[d,e]
    qk = jnp.einsum('bhd,de->bhe', q_all, wk)                   # (B, H, hd)
    # lay out block-diagonally over channels -> (B, H, C)
    qk_bd = (qk[:, :, None, :] * eye[None, :, :, None]).reshape(B, H, C)

    # block-diagonal value projection (already transposed for x @ W^T) + bias
    wv_bd = jnp.kron(eye, wv.T)                                 # (C, C)
    bv_row = jnp.tile(bv, H)[None, :]                           # (1, C)

    # mask[h, c] = 1 iff channel c belongs to head h
    mask = (jnp.arange(C)[None, :] // hd
            == jnp.arange(H)[:, None]).astype(jnp.float32)      # (H, C)

    # explicit VMEM budget: double-buffered feat-in + out blocks + small aux
    blk = batch_tile * S * C * 4
    aux = (batch_tile * H * C + C * C + H * C + C) * 4
    vmem_limit = int(min(96 << 20, max(8 << 20, 4 * blk + 4 * aux + (1 << 20))))

    grid = (B // batch_tile,)
    return pl.pallas_call(
        _attention_kernel,
        out_shape=jax.ShapeDtypeStruct((B, S, C), jnp.float32),
        grid=grid,
        in_specs=[
            pl.BlockSpec((batch_tile, S, C), lambda i: (i, 0, 0)),   # features
            pl.BlockSpec((batch_tile, H, C), lambda i: (i, 0, 0)),   # qk_bd
            pl.BlockSpec((C, C), lambda i: (0, 0)),                  # wv_bd
            pl.BlockSpec((1, C), lambda i: (0, 0)),                  # bv_row
            pl.BlockSpec((H, C), lambda i: (0, 0)),                  # mask
        ],
        out_specs=pl.BlockSpec((batch_tile, S, C), lambda i: (i, 0, 0)),
        compiler_params=pltpu.CompilerParams(
            dimension_semantics=("parallel",),
            vmem_limit_bytes=vmem_limit),
    )(features, qk_bd, wv_bd, bv_row, mask)


def reference_forward(features, preference, params):
    """Pure-JAX reference mirroring the PyTorch forward (un-factorized)."""
    B, S, C = features.shape
    H = preference.shape[1]
    hd = C // H
    wq, bq, wk, bk, wv, bv = params
    outs = []
    for h in range(H):
        p = preference[:, h]                                   # (B,)
        q = p[:, None] * wq[:, 0][None, :] + bq[None, :]       # (B, hd)
        Q = jnp.broadcast_to(q[:, None, :], (B, S, hd))
        f = features[:, :, h * hd:(h + 1) * hd]
        K = f @ wk.T + bk
        V = f @ wv.T + bv
        s = jnp.einsum('bqd,bkd->bqk', Q, K)
        w = jax.nn.softmax(s, axis=-1)
        outs.append(jnp.einsum('bqk,bkd->bqd', w, V))
    return jnp.concatenate(outs, axis=-1) + features


if __name__ == "__main__":
    # small shapes consistent with the module
    batch, step = 2, 8
    preference_dim = 4            # num_heads
    feature_channels = 32         # divisible by preference_dim
    head_dim = feature_channels // preference_dim

    key = jax.random.PRNGKey(0)
    kf, kp, k1, k2, k3, k4, k5, k6 = jax.random.split(key, 8)

    features = jax.random.normal(kf, (batch, step, feature_channels),
                                 dtype=jnp.float32)
    preference = jax.random.normal(kp, (batch, preference_dim),
                                   dtype=jnp.float32)

    # deterministic synthetic parameters (shapes from nn.Linear definitions)
    wq = jax.random.normal(k1, (head_dim, 1), dtype=jnp.float32) * 0.3
    bq = jax.random.normal(k2, (head_dim,), dtype=jnp.float32) * 0.1
    wk = jax.random.normal(k3, (head_dim, head_dim), dtype=jnp.float32) * 0.3
    bk = jax.random.normal(k4, (head_dim,), dtype=jnp.float32) * 0.1
    wv = jax.random.normal(k5, (head_dim, head_dim), dtype=jnp.float32) * 0.3
    bv = jax.random.normal(k6, (head_dim,), dtype=jnp.float32) * 0.1
    params = (wq, bq, wk, bk, wv, bv)

    out = enhanced_dynamic_channel_attention(features, preference, params)
    out = jax.block_until_ready(out)

    ref = reference_forward(features, preference, params)
    assert out.shape == (batch, step, feature_channels)
    # exact softmax normalization + f32 accumulation: error is O(1e-6);
    # tolerance kept at 1e-4 for headroom against MXU rounding modes.
    assert jnp.allclose(out, ref, rtol=1e-4, atol=1e-4), \
        "mismatch vs pure-JAX reference"

    print("KERNEL_OK")
</pallas_src>

<mosaic_0001>
module attributes {stable_mosaic.version = 11 : i64} {
  func.func @_attention_kernel(%arg0: i32, %arg1: memref<1x8x32xf32, #tpu.memory_space<vmem>>, %arg2: memref<1x4x32xf32, #tpu.memory_space<vmem>>, %arg3: memref<32x32xf32, #tpu.memory_space<vmem>>, %arg4: memref<1x32xf32, #tpu.memory_space<vmem>>, %arg5: memref<4x32xf32, #tpu.memory_space<vmem>>, %arg6: memref<1x8x32xf32, #tpu.memory_space<vmem>>) attributes {dimension_semantics = [#tpu.dimension_semantics<parallel>], iteration_bounds = array<i64: 2>, scalar_prefetch = 0 : i64, scratch_operands = 0 : i64, tpu.core_type = #tpu.core_type<tc>, window_params = [{transform_indices = @transform_0, window_bounds = array<i64: 1, 8, 32>}, {transform_indices = @transform_1, window_bounds = array<i64: 1, 4, 32>}, {pipeline_mode = #tpu.pipeline_mode<synchronous>, transform_indices = @transform_2, window_bounds = array<i64: 32, 32>}, {pipeline_mode = #tpu.pipeline_mode<synchronous>, transform_indices = @transform_3, window_bounds = array<i64: 1, 32>}, {pipeline_mode = #tpu.pipeline_mode<synchronous>, transform_indices = @transform_4, window_bounds = array<i64: 4, 32>}, {transform_indices = @transform_5, window_bounds = array<i64: 1, 8, 32>}]} {
    %c0 = arith.constant 0 : index
    %c0_0 = arith.constant 0 : index
    %c0_1 = arith.constant 0 : index
    %0 = vector.load %arg1[%c0, %c0_0, %c0_1] : memref<1x8x32xf32, #tpu.memory_space<vmem>>, vector<1x8x32xf32>
    %c0_2 = arith.constant 0 : index
    %c0_3 = arith.constant 0 : index
    %c0_4 = arith.constant 0 : index
    %1 = vector.load %arg2[%c0_2, %c0_3, %c0_4] : memref<1x4x32xf32, #tpu.memory_space<vmem>>, vector<1x4x32xf32>
    "tpu.trace_start"() <{level = 10 : i32, message = "bhc,bsc->bhs"}> : () -> ()
    %cst = arith.constant dense<0.000000e+00> : vector<1x4x8xf32>
    %2 = tpu.matmul %1, %0, %cst {dimension_numbers = #tpu.dot_dimension_numbers<[2], [2], [1], [1], [0, 0, 0, 1, 1, 1], [0], [0]>} : vector<1x4x32xf32>, vector<1x8x32xf32>, vector<1x4x8xf32> -> vector<1x4x8xf32>
    "tpu.trace_stop"() : () -> ()
    %cst_5 = arith.constant dense<0xFF800000> : vector<1x4xf32>
    %3 = vector.multi_reduction <maximumf>, %2, %cst_5 [2] : vector<1x4x8xf32> to vector<1x4xf32>
    %4 = vector.shape_cast %3 : vector<1x4xf32> to vector<1x4x1xf32>
    %5 = vector.broadcast %4 : vector<1x4x1xf32> to vector<1x4x8xf32>
    %6 = arith.subf %2, %5 : vector<1x4x8xf32>
    %7 = math.exp %6 : vector<1x4x8xf32>
    %cst_6 = arith.constant dense<0.000000e+00> : vector<1x4xf32>
    %8 = vector.multi_reduction <add>, %7, %cst_6 [2] : vector<1x4x8xf32> to vector<1x4xf32>
    %9 = vector.shape_cast %8 : vector<1x4xf32> to vector<1x4x1xf32>
    %10 = vector.broadcast %9 : vector<1x4x1xf32> to vector<1x4x8xf32>
    %11 = arith.divf %7, %10 : vector<1x4x8xf32>
    "tpu.trace_start"() <{level = 10 : i32, message = "bhs,bsc->bhc"}> : () -> ()
    %cst_7 = arith.constant dense<0.000000e+00> : vector<1x4x32xf32>
    %12 = tpu.matmul %11, %0, %cst_7 {dimension_numbers = #tpu.dot_dimension_numbers<[2], [1], [1], [2], [0, 0, 0, 1, 1, 2], [0], [0]>} : vector<1x4x8xf32>, vector<1x8x32xf32>, vector<1x4x32xf32> -> vector<1x4x32xf32>
    "tpu.trace_stop"() : () -> ()
    %c0_8 = arith.constant 0 : index
    %c0_9 = arith.constant 0 : index
    %13 = vector.load %arg5[%c0_8, %c0_9] : memref<4x32xf32, #tpu.memory_space<vmem>>, vector<4x32xf32>
    %14 = vector.shape_cast %13 : vector<4x32xf32> to vector<1x4x32xf32>
    %15 = arith.mulf %12, %14 : vector<1x4x32xf32>
    %cst_10 = arith.constant dense<0.000000e+00> : vector<1x32xf32>
    %16 = vector.multi_reduction <add>, %15, %cst_10 [1] : vector<1x4x32xf32> to vector<1x32xf32>
    %c0_11 = arith.constant 0 : index
    %c0_12 = arith.constant 0 : index
    %17 = vector.load %arg3[%c0_11, %c0_12] : memref<32x32xf32, #tpu.memory_space<vmem>>, vector<32x32xf32>
    %cst_13 = arith.constant dense<0.000000e+00> : vector<1x32xf32>
    %18 = tpu.matmul %16, %17, %cst_13 {dimension_numbers = #tpu.dot_dimension_numbers<[1], [0], [0], [1], [0, 0, 1, 1], [], []>} : vector<1x32xf32>, vector<32x32xf32>, vector<1x32xf32> -> vector<1x32xf32>
    %c0_14 = arith.constant 0 : index
    %c0_15 = arith.constant 0 : index
    %19 = vector.load %arg4[%c0_14, %c0_15] : memref<1x32xf32, #tpu.memory_space<vmem>>, vector<1x32xf32>
    %20 = arith.addf %18, %19 : vector<1x32xf32>
    %21 = vector.shape_cast %20 : vector<1x32xf32> to vector<1x1x32xf32>
    %22 = vector.broadcast %21 : vector<1x1x32xf32> to vector<1x8x32xf32>
    %23 = arith.addf %22, %0 : vector<1x8x32xf32>
    %c0_16 = arith.constant 0 : index
    %c0_17 = arith.constant 0 : index
    %c0_18 = arith.constant 0 : index
    %24 = vector.load %arg6[%c0_16, %c0_17, %c0_18] : memref<1x8x32xf32, #tpu.memory_space<vmem>>, vector<1x8x32xf32>
    tpu.vector_store %arg6[%c0_16, %c0_17, %c0_18], %23 {strides = array<i32>} : memref<1x8x32xf32, #tpu.memory_space<vmem>>, vector<1x8x32xf32>,
    return
  }
  func.func @transform_0(%arg0: i32) -> (i32, i32, i32) {
    %c0_i32 = arith.constant 0 : i32
    %c0_i32_0 = arith.constant 0 : i32
    %c0_i32_1 = arith.constant 0 : i32
    return %arg0, %c0_i32, %c0_i32_0 : i32, i32, i32
  }
  func.func @transform_1(%arg0: i32) -> (i32, i32, i32) {
    %c0_i32 = arith.constant 0 : i32
    %c0_i32_0 = arith.constant 0 : i32
    %c0_i32_1 = arith.constant 0 : i32
    return %arg0, %c0_i32, %c0_i32_0 : i32, i32, i32
  }
  func.func @transform_2(%arg0: i32) -> (i32, i32) {
    %c0_i32 = arith.constant 0 : i32
    %c0_i32_0 = arith.constant 0 : i32
    %c0_i32_1 = arith.constant 0 : i32
    return %c0_i32, %c0_i32_0 : i32, i32
  }
  func.func @transform_3(%arg0: i32) -> (i32, i32) {
    %c0_i32 = arith.constant 0 : i32
    %c0_i32_0 = arith.constant 0 : i32
    %c0_i32_1 = arith.constant 0 : i32
    return %c0_i32, %c0_i32_0 : i32, i32
  }
  func.func @transform_4(%arg0: i32) -> (i32, i32) {
    %c0_i32 = arith.constant 0 : i32
    %c0_i32_0 = arith.constant 0 : i32
    %c0_i32_1 = arith.constant 0 : i32
    return %c0_i32, %c0_i32_0 : i32, i32
  }
  func.func @transform_5(%arg0: i32) -> (i32, i32, i32) {
    %c0_i32 = arith.constant 0 : i32
    %c0_i32_0 = arith.constant 0 : i32
    %c0_i32_1 = arith.constant 0 : i32
    return %arg0, %c0_i32, %c0_i32_0 : i32, i32, i32
  }
}

</mosaic_0001>

<llo_original>
// kernel: tpu_custom_call.1
$region0: #{tpu_custom_call.1}
  #allocation0 [shape = 'u32[]', space=smem, size = 0x4, offset = 0x4, fixed_abs, tag = 'smem constant byte address 0x4 - core index']
  #allocation1 [shape = 'u32[72,128]{1,0:T(1,128)}', space=vmem, size = 0x9000, scoped, tag = 'internal scratch']
  %s0 = inlined_call_operand.hbm [shape: f32[2,8,32], index: 0, kind: input, shape index: {}]
  %s1 = inlined_call_operand.hbm [shape: f32[2,4,32], index: 1, kind: input, shape index: {}]
  %s2 = inlined_call_operand.hbm [shape: f32[32,32], index: 2, kind: input, shape index: {}]
  %s3 = inlined_call_operand.vmem [shape: f32[1,32], index: 3, kind: input, shape index: {}]
  %s4 = inlined_call_operand.hbm [shape: f32[4,32], index: 4, kind: input, shape index: {}]
  %s5 = inlined_call_operand.hbm [shape: f32[2,8,32], index: 5, kind: output, shape index: {}]
  %s6 = sld [smem:[#allocation0]]
  $region69: #{tpu_custom_call.1} parent=0
    _
  %s8 = ssub.s32 1, %s6
  %s9 = scalar_select 0, %s8, %s6
  $region1: #{tpu_custom_call.1} parent=0
    #allocation2 [shape = 'u8[8192]{0}', space=vmem, size = 0x2000, scoped, tag = 'input window, operand 0']
    #allocation3 [shape = 's32[2]{0}', space=sflag, size = 0x8, scoped, tag = 'scoped memory for tpu_custom_call.1']
    #allocation4 [shape = 's32[2]{0}', space=sflag, size = 0x8, scoped, tag = 'scoped memory for tpu_custom_call.1']
    #allocation5 [shape = 'u8[4096]{0}', space=vmem, size = 0x1000, scoped, tag = 'input window, operand 1']
    #allocation6 [shape = 's32[2]{0}', space=sflag, size = 0x8, scoped, tag = 'scoped memory for tpu_custom_call.1']
    #allocation7 [shape = 'u8[16384]{0}', space=vmem, size = 0x4000, scoped, tag = 'input window, operand 2, single buffered']
    #allocation8 [shape = 'u8[2048]{0}', space=vmem, size = 0x800, scoped, tag = 'input window, operand 4, single buffered']
    #allocation9 [shape = 's32[1]{0}', space=sflag, size = 0x4, scoped, tag = 'scoped memory for tpu_custom_call.1']
    #allocation10 [shape = 'u8[8192]{0}', space=vmem, size = 0x2000, scoped, tag = 'output window, operand 0']
    %10 = vsyncpa [#allocation3], 0
    %s11 = scalar_lea.sflag [#allocation3], 1
    %12 = vsyncpa %s11, 0
    %13 = vsyncpa [#allocation6], 0
    %s14 = scalar_lea.sflag [#allocation6], 1
    %15 = vsyncpa %s14, 0
    %16 = vsyncpa [#allocation9], 0
    %17 = vsyncpa [#allocation4], 0
    %s18 = scalar_lea.sflag [#allocation4], 1
    %19 = vsyncpa %s18, 0
    loop: start=0, step=1, limit=4
    $region2: #{tpu_custom_call.1} parent=1 // loop_pre_header
      _
    $region3: #{tpu_custom_call.1} parent=1 // loop_header
      %s21 = sphi 0, %s25
      %p22 = scmp.ge.s32.totalorder %s21, 4
      %s31 = sphi 0, %s33
      %s34 = sphi 0, %s31
      %s35 = sphi 0, %s34
      %s51 = sphi 0, %s35
      %s57 = sphi 0, %s59
      %s60 = sphi 0, %s57
      %s61 = sphi 0, %s60
      %s77 = sphi 0, %s61
      %s81 = sphi 0, %s81
      %s83 = sphi 0, %s81
      %s84 = sphi 0, %s83
      %s98 = sphi 0, %s84
      %s102 = sphi 0, %s102
      %s104 = sphi 0, %s102
      %s105 = sphi 0, %s104
      %s119 = sphi 0, %s105
      %s123 = sphi 0, %s123
      %s125 = sphi 0, %s123
      %s126 = sphi 0, %s125
      %s140 = sphi 0, %s126
      %s146 = sphi 0, %s148
      %s149 = sphi 0, %s146
      %s150 = sphi 0, %s149
      %s166 = sphi 0, %s150
    $region4: #{tpu_custom_call.1} parent=1 // loop_header_branch
      %24 = sbr.rel (%p22) target = $region8
    $region5: #{tpu_custom_call.1} parent=1 // loop_body
      %s26 = ssub.s32 %s21, 1
      %s27 = ssub.s32 %s21, 2
      %s28 = sadd.s32 %s21, 1
      %s29 = ssub.s32 %s21, %s28
      %p30 = scmp.eq.s32.totalorder %s29, 0
      %s32 = sadd.s32 %s31, 1
      %s33 = scalar_select %p30, %s31, %s32
      %p36 = pneg %p30
      %p37 = scmp.eq.s32.totalorder %s21, 1
      %p38 = por %p36, %p37
      %p39 = scmp.ne.s32.totalorder %s31, %s34
      %p40 = scmp.eq.s32.totalorder %s21, 0
      %p41 = por %p39, %p40
      %p42 = scmp.ne.s32.totalorder %s31, %s34
      %p43 = scmp.eq.s32.totalorder %s26, 1
      %p44 = por %p42, %p43
      %p45 = scmp.ne.s32.totalorder %s34, %s35
      %p46 = scmp.eq.s32.totalorder %s26, 0
      %p47 = por %p45, %p46
      %p48 = scmp.ne.s32.totalorder %s34, %s35
      %p49 = scmp.eq.s32.totalorder %s27, 1
      %p50 = por %p48, %p49
      %p52 = scmp.ne.s32.totalorder %s35, %s51
      %p53 = scmp.eq.s32.totalorder %s27, 0
      %p54 = por %p52, %p53
      %s55 = ssub.s32 %s21, %s28
      %p56 = scmp.eq.s32.totalorder %s55, 0
      %s58 = sadd.s32 %s57, 1
      %s59 = scalar_select %p56, %s57, %s58
      %p62 = pneg %p56
      %p63 = scmp.eq.s32.totalorder %s21, 1
      %p64 = por %p62, %p63
      %p65 = scmp.ne.s32.totalorder %s57, %s60
      %p66 = scmp.eq.s32.totalorder %s21, 0
      %p67 = por %p65, %p66
      %p68 = scmp.ne.s32.totalorder %s57, %s60
      %p69 = scmp.eq.s32.totalorder %s26, 1
      %p70 = por %p68, %p69
      %p71 = scmp.ne.s32.totalorder %s60, %s61
      %p72 = scmp.eq.s32.totalorder %s26, 0
      %p73 = por %p71, %p72
      %p74 = scmp.ne.s32.totalorder %s60, %s61
      %p75 = scmp.eq.s32.totalorder %s27, 1
      %p76 = por %p74, %p75
      %p78 = scmp.ne.s32.totalorder %s61, %s77
      %p79 = scmp.eq.s32.totalorder %s27, 0
      %p80 = por %p78, %p79
      %s82 = sadd.s32 %s81, 1
      %p85 = scmp.eq.s32.totalorder %s21, 1
      %p86 = scmp.ne.s32.totalorder %s81, %s83
      %p87 = scmp.eq.s32.totalorder %s21, 0
      %p88 = por %p86, %p87
      %p89 = scmp.ne.s32.totalorder %s81, %s83
      %p90 = scmp.eq.s32.totalorder %s26, 1
      %p91 = por %p89, %p90
      %p92 = scmp.ne.s32.totalorder %s83, %s84
      %p93 = scmp.eq.s32.totalorder %s26, 0
      %p94 = por %p92, %p93
      %p95 = scmp.ne.s32.totalorder %s83, %s84
      %p96 = scmp.eq.s32.totalorder %s27, 1
      %p97 = por %p95, %p96
      %p99 = scmp.ne.s32.totalorder %s84, %s98
      %p100 = scmp.eq.s32.totalorder %s27, 0
      %p101 = por %p99, %p100
      %s103 = sadd.s32 %s102, 1
      %p106 = scmp.eq.s32.totalorder %s21, 1
      %p107 = scmp.ne.s32.totalorder %s102, %s104
      %p108 = scmp.eq.s32.totalorder %s21, 0
      %p109 = por %p107, %p108
      %p110 = scmp.ne.s32.totalorder %s102, %s104
      %p111 = scmp.eq.s32.totalorder %s26, 1
      %p112 = por %p110, %p111
      %p113 = scmp.ne.s32.totalorder %s104, %s105
      %p114 = scmp.eq.s32.totalorder %s26, 0
      %p115 = por %p113, %p114
      %p116 = scmp.ne.s32.totalorder %s104, %s105
      %p117 = scmp.eq.s32.totalorder %s27, 1
      %p118 = por %p116, %p117
      %p120 = scmp.ne.s32.totalorder %s105, %s119
      %p121 = scmp.eq.s32.totalorder %s27, 0
      %p122 = por %p120, %p121
      %s124 = sadd.s32 %s123, 1
      %p127 = scmp.eq.s32.totalorder %s21, 1
      %p128 = scmp.ne.s32.totalorder %s123, %s125
      %p129 = scmp.eq.s32.totalorder %s21, 0
      %p130 = por %p128, %p129
      %p131 = scmp.ne.s32.totalorder %s123, %s125
      %p132 = scmp.eq.s32.totalorder %s26, 1
      %p133 = por %p131, %p132
      %p134 = scmp.ne.s32.totalorder %s125, %s126
      %p135 = scmp.eq.s32.totalorder %s26, 0
      %p136 = por %p134, %p135
      %p137 = scmp.ne.s32.totalorder %s125, %s126
      %p138 = scmp.eq.s32.totalorder %s27, 1
      %p139 = por %p137, %p138
      %p141 = scmp.ne.s32.totalorder %s126, %s140
      %p142 = scmp.eq.s32.totalorder %s27, 0
      %p143 = por %p141, %p142
      %s144 = ssub.s32 %s21, %s28
      %p145 = scmp.eq.s32.totalorder %s144, 0
      %s147 = sadd.s32 %s146, 1
      %s148 = scalar_select %p145, %s146, %s147
      %p151 = pneg %p145
      %p152 = scmp.eq.s32.totalorder %s21, 1
      %p153 = por %p151, %p152
      %p154 = scmp.ne.s32.totalorder %s146, %s149
      %p155 = scmp.eq.s32.totalorder %s21, 0
      %p156 = por %p154, %p155
      %p157 = scmp.ne.s32.totalorder %s146, %s149
      %p158 = scmp.eq.s32.totalorder %s26, 1
      %p159 = por %p157, %p158
      %p160 = scmp.ne.s32.totalorder %s149, %s150
      %p161 = scmp.eq.s32.totalorder %s26, 0
      %p162 = por %p160, %p161
      %p163 = scmp.ne.s32.totalorder %s149, %s150
      %p164 = scmp.eq.s32.totalorder %s27, 1
      %p165 = por %p163, %p164
      %p167 = scmp.ne.s32.totalorder %s150, %s166
      %p168 = scmp.eq.s32.totalorder %s27, 0
      %p169 = por %p167, %p168
      %p170 = scmp.le.s32.totalorder 1, %s21
      %p171 = scmp.lt.s32.totalorder %s21, 3
      %p172 = pnand %p170, %p171
      %p173 = pneg %p172
      // Predicated region
      $region9: #{tpu_custom_call.1} parent=5 // pred_check
        _
      $region10: #{tpu_custom_call.1} parent=5 // pred_check_branch
        %175 = sbr.rel (%p172) target = $region12
      $region11: #{tpu_custom_call.1} parent=5 // pred_region
        %s176 = ssub.s32 %s21, 1
        // Predicated region
        $region13: #{tpu_custom_call.1} parent=11 // pred_check
          %p177 = pneg %p94
        $region14: #{tpu_custom_call.1} parent=11 // pred_check_branch
          %179 = sbr.rel (%p177) target = $region16
        $region15: #{tpu_custom_call.1} parent=11 // pred_region
          %181 = vsyncadd [#allocation6], 0
          %s182 = sshll.u32 %s2, 4
          %s183 = int_to_ptr.hbm [resolvable:$true] %s182
          %s184 = sshll.u32 [#allocation7], 4
          %s185 = int_to_ptr.vmem [resolvable:$true] %s184
          %190 = dma.hbm_to_vmem [thread:$0]  %s183, 512, %s185, [#allocation6], 128, 128, 8
        $region16: #{tpu_custom_call.1} parent=11 // pred_fallthru
          _
        // Predicated region
        $region17: #{tpu_custom_call.1} parent=11 // pred_check
          %p191 = pneg %p115
        $region18: #{tpu_custom_call.1} parent=11 // pred_check_branch
          %193 = sbr.rel (%p191) target = $region20
        $region19: #{tpu_custom_call.1} parent=11 // pred_region
          _
        $region20: #{tpu_custom_call.1} parent=11 // pred_fallthru
          _
        // Predicated region
        $region21: #{tpu_custom_call.1} parent=11 // pred_check
          %p194 = pneg %p136
        $region22: #{tpu_custom_call.1} parent=11 // pred_check_branch
          %196 = sbr.rel (%p194) target = $region24
        $region23: #{tpu_custom_call.1} parent=11 // pred_region
          %198 = vsyncadd [#allocation9], 0
          %s200 = sshll.u32 %s4, 4
          %s201 = int_to_ptr.hbm [resolvable:$true] %s200
          %s202 = sshll.u32 [#allocation8], 4
          %s203 = int_to_ptr.vmem [resolvable:$true] %s202
          %205 = dma.hbm_to_vmem [thread:$0]  %s201, 64, %s203, [#allocation9]
        $region24: #{tpu_custom_call.1} parent=11 // pred_fallthru
          _
      $region12: #{tpu_custom_call.1} parent=5 // pred_fallthru
        _
      %p206 = scmp.lt.s32.totalorder %s21, 2
      // Predicated region
      $region25: #{tpu_custom_call.1} parent=5 // pred_check
        %p207 = pneg %p206
      $region26: #{tpu_custom_call.1} parent=5 // pred_check_branch
        %209 = sbr.rel (%p207) target = $region28
      $region27: #{tpu_custom_call.1} parent=5 // pred_region
        // Predicated region
        $region29: #{tpu_custom_call.1} parent=27 // pred_check
          %p210 = pneg %p41
        $region30: #{tpu_custom_call.1} parent=27 // pred_check_branch
          %212 = sbr.rel (%p210) target = $region32
        $region31: #{tpu_custom_call.1} parent=27 // pred_region
          %s213 = sand.u32 %s31, 1
          %s214 = scalar_lea.sflag [#allocation3], %s213
          %s215 = sand.u32 %s31, 1
          %s216 = smul.addr %s215, 8
          %s217 = scalar_lea.vmem [#allocation2], %s216
          %219 = vsyncadd %s214, 0
          %s220 = smul.addr %s21, 8
          %s221 = scalar_lea.hbm %s0, %s220
          %s223 = sshll.u32 %s221, 4
          %s224 = int_to_ptr.hbm [resolvable:$true] %s223
          %s225 = sshll.u32 %s217, 4
          %s226 = int_to_ptr.vmem [resolvable:$true] %s225
          %228 = dma.hbm_to_vmem [thread:$0]  %s224, 128, %s226, %s214
        $region32: #{tpu_custom_call.1} parent=27 // pred_fallthru
          _
        // Predicated region
        $region33: #{tpu_custom_call.1} parent=27 // pred_check
          %p229 = pneg %p67
        $region34: #{tpu_custom_call.1} parent=27 // pred_check_branch
          %231 = sbr.rel (%p229) target = $region36
        $region35: #{tpu_custom_call.1} parent=27 // pred_region
          %s232 = sand.u32 %s21, 1
          %s233 = scalar_lea.sflag [#allocation6], %s232
          %s234 = sand.u32 %s57, 1
          %s235 = smul.addr %s234, 4
          %s236 = scalar_lea.vmem [#allocation5], %s235
          %238 = vsyncadd %s233, 0
          %s239 = smul.addr %s21, 4
          %s240 = scalar_lea.hbm %s1, %s239
          %s242 = sshll.u32 %s240, 4
          %s243 = int_to_ptr.hbm [resolvable:$true] %s242
          %s244 = sshll.u32 %s236, 4
          %s245 = int_to_ptr.vmem [resolvable:$true] %s244
          %247 = dma.hbm_to_vmem [thread:$0]  %s243, 64, %s245, %s233
        $region36: #{tpu_custom_call.1} parent=27 // pred_fallthru
          _
      $region28: #{tpu_custom_call.1} parent=5 // pred_fallthru
        _
      %p248 = scmp.le.s32.totalorder 1, %s21
      %p249 = scmp.lt.s32.totalorder %s21, 3
      %p250 = pnand %p248, %p249
      %p251 = pneg %p250
      // Predicated region
      $region37: #{tpu_custom_call.1} parent=5 // pred_check
        _
      $region38: #{tpu_custom_call.1} parent=5 // pred_check_branch
        %253 = sbr.rel (%p250) target = $region40
      $region39: #{tpu_custom_call.1} parent=5 // pred_region
        %s254 = ssub.s32 %s21, 1
        %s255 = sand.u32 %s34, 1
        %s256 = scalar_lea.sflag [#allocation3], %s255
        %s257 = sand.u32 %s34, 1
        %s258 = smul.addr %s257, 8
        %s259 = scalar_lea.vmem [#allocation2], %s258
        // Predicated region
        $region41: #{tpu_custom_call.1} parent=39 // pred_check
          %p260 = pneg %p47
        $region42: #{tpu_custom_call.1} parent=39 // pred_check_branch
          %262 = sbr.rel (%p260) target = $region44
        $region43: #{tpu_custom_call.1} parent=39 // pred_region
          %264 = dma.done %s256, 128
        $region44: #{tpu_custom_call.1} parent=39 // pred_fallthru
          _
        %s265 = sand.u32 %s26, 1
        %s266 = scalar_lea.sflag [#allocation6], %s265
        %s267 = sand.u32 %s60, 1
        %s268 = smul.addr %s267, 4
        %s269 = scalar_lea.vmem [#allocation5], %s268
        // Predicated region
        $region45: #{tpu_custom_call.1} parent=39 // pred_check
          %p270 = pneg %p73
        $region46: #{tpu_custom_call.1} parent=39 // pred_check_branch
          %272 = sbr.rel (%p270) target = $region48
        $region47: #{tpu_custom_call.1} parent=39 // pred_region
          %274 = dma.done %s266, 64
        $region48: #{tpu_custom_call.1} parent=39 // pred_fallthru
          _
        // Predicated region
        $region49: #{tpu_custom_call.1} parent=39 // pred_check
          %p275 = pneg %p94
        $region50: #{tpu_custom_call.1} parent=39 // pred_check_branch
          %277 = sbr.rel (%p275) target = $region52
        $region51: #{tpu_custom_call.1} parent=39 // pred_region
          %279 = dma.done [#allocation6], 512
        $region52: #{tpu_custom_call.1} parent=39 // pred_fallthru
          _
        // Predicated region
        $region53: #{tpu_custom_call.1} parent=39 // pred_check
          %p280 = pneg %p136
        $region54: #{tpu_custom_call.1} parent=39 // pred_check_branch
          %282 = sbr.rel (%p280) target = $region56
        $region55: #{tpu_custom_call.1} parent=39 // pred_region
          %284 = dma.done [#allocation9], 64
        $region56: #{tpu_custom_call.1} parent=39 // pred_fallthru
          _
        %s285 = sand.u32 %s34, 1
        %s286 = scalar_lea.sflag [#allocation3], %s285
        %s287 = sand.u32 %s34, 1
        %s288 = smul.addr %s287, 8
        %s289 = scalar_lea.vmem [#allocation2], %s288
        %p290 = pneg %p47
        %p291 = pneg %p44
        %s292 = sand.u32 %s26, 1
        %s293 = scalar_lea.sflag [#allocation6], %s292
        %s294 = sand.u32 %s60, 1
        %s295 = smul.addr %s294, 4
        %s296 = scalar_lea.vmem [#allocation5], %s295
        %p297 = pneg %p73
        %p298 = pneg %p70
        %p299 = pneg %p94
        %p300 = pneg %p91
        %p301 = pneg %p115
        %p302 = pneg %p112
        %p303 = pneg %p136
        %p304 = pneg %p133
        %p305 = pneg %p162
        %p306 = pneg %p159
        %s307 = sand.u32 %s149, 1
        %s308 = scalar_lea.sflag [#allocation4], %s307
        %s309 = sand.u32 %s149, 1
        %s310 = smul.addr %s309, 8
        %s311 = scalar_lea.vmem [#allocation10], %s310
        %v312 = vld [vmem:[%s259] sm:$0xff]
        %v313 = vld [vmem:[%s269] sm:$0xf]
        %vm314 = vcmask 261120
        %v316 = vsel %vm314, %v313, 0
        %v319 = vsel %vm314, %v312, 0
        %321 = vmatpush.xpose.msra.mxu0 0.0
        %322 = vmatpush.xpose.msra.mxu0 0.0
        %323 = vmatpush.xpose.msra.mxu0 0.0
        %324 = vmatpush.xpose.msra.mxu0 0.0
        %325 = vmatpush.xpose.msra.mxu0 0.0
        %326 = vmatpush.xpose.msra.mxu0 0.0
        %327 = vmatpush.xpose.msra.mxu0 0.0
        %328 = vmatpush.xpose.msra.mxu0 0.0
        %329 = vmatpush.xpose.msra.mxu0 0.0
        %330 = vmatpush.xpose.msra.mxu0 0.0
        %331 = vmatpush.xpose.msra.mxu0 0.0
        %332 = vmatpush.xpose.msra.mxu0 0.0
        %333 = vmatpush.xpose.msra.mxu0 0.0
        %334 = vmatpush.xpose.msra.mxu0 0.0
        %335 = vmatpush.xpose.msra.mxu0 0.0
        %336 = vmatpush.xpose.msra.mxu0 %v319
        %337 = vmatmul.f32.gmra.mxu0 %v316
        %v338 = vpop.f32.mrf.mxu0
        %v339 = vadd.f32 0.0, %v338
        %340 = vdwg.mxu0
        %vm341 = vcmask 60416
        %v342 = vsel %vm341, %v339, -inf
        %343 = vmax.xlane.f32.xlu0 %v342
        %v344 = vpop.xlane.xlu0 %343
        %v345 = vsub.f32 %v339, %v344
        %v346 = vmul.f32 %v345, 1.442695
        %v347 = vpow.pop %v346
        %v348 = vsel %vm341, %v347, 0.0
        %349 = vadd.xlane.f32.xlu0 %v348
        %v350 = vpop.xlane.xlu0 %349
        %v351 = vrcp.pop %v350
        %v352 = vmul.f32 %v350, %v351
        %v353 = vsub.f32 1.0, %v352
        %v354 = vmul.f32 %v351, %v353
        %v355 = vadd.f32 %v351, %v354
        %vm356 = vweird.f32 %v350
        %vm357 = vweird.f32 %v351
        %vm358 = vmor %vm356, %vm357
        %v359 = vsel %vm358, %v351, %v355
        %v360 = vand.u32 2147483647, %v350
        %vm361 = vcmp.eq.f32.partialorder %v360, 8.507059e+37
        %v362 = vand.u32 %v350, 2147483648
        %v363 = vor.u32 1.1754944e-38, %v362
        %v364 = vsel %vm361, %v363, %v359
        %v365 = vmul.f32 %v347, %v364
        %vm366 = vcmask 64512
        %v368 = vsel %vm366, %v365, 0
        %370 = vmatpush.msra.mxu0 0.0
        %371 = vmatpush.msra.mxu0 0.0
        %372 = vmatpush.msra.mxu0 0.0
        %373 = vmatpush.msra.mxu0 0.0
        %374 = vmatpush.msra.mxu0 0.0
        %375 = vmatpush.msra.mxu0 0.0
        %376 = vmatpush.msra.mxu0 0.0
        %377 = vmatpush.msra.mxu0 0.0
        %378 = vmatpush.msra.mxu0 0.0
        %379 = vmatpush.msra.mxu0 0.0
        %380 = vmatpush.msra.mxu0 0.0
        %381 = vmatpush.msra.mxu0 0.0
        %382 = vmatpush.msra.mxu0 0.0
        %383 = vmatpush.msra.mxu0 0.0
        %384 = vmatpush.msra.mxu0 0.0
        %385 = vmatpush.msra.mxu0 %v312
        %386 = vmatmul.f32.gmra.mxu0 %v368
        %v387 = vpop.f32.mrf.mxu0
        %v388 = vadd.f32 0.0, %v387
        %389 = vdwg.mxu0
        %v390 = vld [vmem:[#allocation8] sm:$0xf]
        %v391 = vmul.f32 %v388, %v390
        %vm392 = vcmask 257024
        %v393 = vsel %vm392, %v391, 0.0
        %v394 = vrot.slane %v393, 4
        %v395 = vadd.f32 %v393, %v394
        %v396 = vrot.slane %v395, 2
        %v397 = vadd.f32 %v395, %v396
        %v398 = vrot.slane %v397, 1
        %v399 = vadd.f32 %v397, %v398
        %v400 = vld [vmem:[#allocation7] sm:$0xff]
        %v401 = vld [vmem:[#allocation7 + $0x8] sm:$0xff]
        %v402 = vld [vmem:[#allocation7 + $0x10] sm:$0xff]
        %v403 = vld [vmem:[#allocation7 + $0x18] sm:$0xff]
        %v404 = vld [vmem:[%s3] sm:$0x1]
        %v406 = vsel %vm314, %v399, 0
        %408 = vmatpush.msra.mxu0 0.0
        %409 = vmatpush.msra.mxu0 0.0
        %410 = vmatpush.msra.mxu0 0.0
        %411 = vmatpush.msra.mxu0 0.0
        %412 = vmatpush.msra.mxu0 0.0
        %413 = vmatpush.msra.mxu0 0.0
        %414 = vmatpush.msra.mxu0 0.0
        %415 = vmatpush.msra.mxu0 0.0
        %416 = vmatpush.msra.mxu0 0.0
        %417 = vmatpush.msra.mxu0 0.0
        %418 = vmatpush.msra.mxu0 0.0
        %419 = vmatpush.msra.mxu0 0.0
        %420 = vmatpush.msra.mxu0 %v403
        %421 = vmatpush.msra.mxu0 %v402
        %422 = vmatpush.msra.mxu0 %v401
        %423 = vmatpush.msra.mxu0 %v400
        %424 = vmatmul.f32.gmra.mxu0 %v406
        %v425 = vpop.f32.mrf.mxu0
        %v426 = vadd.f32 %v404, %v425
        %427 = vdwg.mxu0
        %v428 = vperm.slane %v426, 0
        %v429 = vadd.f32 %v428, %v312
        %430 = vst.msk [vmem:[%s311] sm:$0xff] %vm314, %v429
        %s431 = sand.u32 %s149, 1
        %s432 = scalar_lea.sflag [#allocation4], %s431
        %s433 = sand.u32 %s149, 1
        %s434 = smul.addr %s433, 8
        %s435 = scalar_lea.vmem [#allocation10], %s434
        // Predicated region
        $region57: #{tpu_custom_call.1} parent=39 // pred_check
          %p436 = pneg %p159
        $region58: #{tpu_custom_call.1} parent=39 // pred_check_branch
          %438 = sbr.rel (%p436) target = $region60
        $region59: #{tpu_custom_call.1} parent=39 // pred_region
          %440 = vsyncadd %s432, 0
          %s441 = smul.addr %s26, 8
          %s442 = scalar_lea.hbm %s5, %s441
          %s444 = sshll.u32 %s435, 4
          %s445 = int_to_ptr.vmem [resolvable:$true] %s444
          %s446 = sshll.u32 %s442, 4
          %s447 = int_to_ptr.hbm [resolvable:$true] %s446
          %449 = dma.vmem_to_hbm [thread:$0]  %s445, 128, %s447, %s432
        $region60: #{tpu_custom_call.1} parent=39 // pred_fallthru
          _
      $region40: #{tpu_custom_call.1} parent=5 // pred_fallthru
        _
      %p450 = scmp.le.s32.totalorder 2, %s21
      // Predicated region
      $region61: #{tpu_custom_call.1} parent=5 // pred_check
        %p451 = pneg %p450
      $region62: #{tpu_custom_call.1} parent=5 // pred_check_branch
        %453 = sbr.rel (%p451) target = $region64
      $region63: #{tpu_custom_call.1} parent=5 // pred_region
        %s454 = ssub.s32 %s21, 2
        // Predicated region
        $region65: #{tpu_custom_call.1} parent=63 // pred_check
          %p455 = pneg %p165
        $region66: #{tpu_custom_call.1} parent=63 // pred_check_branch
          %457 = sbr.rel (%p455) target = $region68
        $region67: #{tpu_custom_call.1} parent=63 // pred_region
          %s458 = sand.u32 %s150, 1
          %s459 = scalar_lea.sflag [#allocation4], %s458
          %s460 = sand.u32 %s150, 1
          %s461 = smul.addr %s460, 8
          %s462 = scalar_lea.vmem [#allocation10], %s461
          %464 = dma.done %s459, 128
        $region68: #{tpu_custom_call.1} parent=63 // pred_fallthru
          _
      $region64: #{tpu_custom_call.1} parent=5 // pred_fallthru
        _
    $region6: #{tpu_custom_call.1} parent=1 // loop_footer
      %s25 = sadd.s32 1, %s21
    $region7: #{tpu_custom_call.1} parent=1 // loop_footer_branch
      %20 = sbr.rel target = $region3
    $region8: #{tpu_custom_call.1} parent=1 // loop_exit
      _
    %465 = vsyncpa [#allocation3], 1
    %s466 = scalar_lea.sflag [#allocation3], 1
    %467 = vsyncpa %s466, 1
    %468 = vsyncpa [#allocation6], 1
    %s469 = scalar_lea.sflag [#allocation6], 1
    %470 = vsyncpa %s469, 1
    %471 = vsyncpa [#allocation9], 1
    %472 = vsyncpa [#allocation4], 1
    %s473 = scalar_lea.sflag [#allocation4], 1
    %474 = vsyncpa %s473, 1

</llo_original>
